<compile_context>
chip_gen: v5e
topology: v5e:2x2
jax: 0.10.0
libtpu: 0.0.40
codegen_flags: <defaults>
</compile_context>

<pallas_src>
import jax
import jax.numpy as jnp
from jax import lax
from jax.experimental import pallas as pl
from jax.experimental.pallas import tpu as pltpu

HIDDEN = 20000                            # fixed by the module definition
CHUNK = 2048                              # hidden lanes processed per inner-loop step
NC = (HIDDEN + CHUNK - 1) // CHUNK        # 10 chunk rows
HIDDEN_PAD = NC * CHUNK                   # 20480 (zero-padded; pads contribute 0)
LANES = 128
MAX_TB = 128                              # max batch tile (sublane multiple)


def _round_up(n, m):
    return ((n + m - 1) // m) * m


def mlp_kernel(x_ref, w1_ref, b1_ref, w2_ref, b2_ref, o_ref):
    # x_ref : (TB, 1)
    # w1_ref, b1_ref, w2_ref : (NC, CHUNK)   hidden axis pre-chunked, VMEM-resident
    # b2_ref: (1, 1)
    # o_ref : (TB, 1)                        final output for this batch tile
    x = x_ref[...]                                         # (TB, 1)
    tb = x.shape[0]

    def body(c, acc):
        w1c = w1_ref[pl.ds(c, 1), :]                       # (1, CHUNK)
        b1c = b1_ref[pl.ds(c, 1), :]
        w2c = w2_ref[pl.ds(c, 1), :]
        # Layer 1 (in_features == 1): broadcast multiply-add on the VPU.
        h = jnp.maximum(x * w1c + b1c, 0.0)                # (TB, CHUNK)
        p = h * w2c                                        # (TB, CHUNK)
        # Accumulate 128-lane groups with plain VPU adds (keeps the inner loop
        # off the XLU); static 128-aligned lane slices, no relayout.
        for j in range(CHUNK // LANES):
            acc = acc + p[:, j * LANES:(j + 1) * LANES]
        return acc

    acc = lax.fori_loop(0, NC, body, jnp.zeros((tb, LANES), jnp.float32))
    # Single 128->1 lane reduction per batch tile, then add output bias.
    out = jnp.sum(acc, axis=-1, keepdims=True) + b2_ref[...]   # (TB, 1)
    o_ref[...] = out.astype(o_ref.dtype)


def prepare_params(w1, b1, w2):
    """One-time param prep (store these as the canonical params):
    zero-pad hidden axis to HIDDEN_PAD and reshape to (NC, CHUNK) chunk rows.
    Padded lanes contribute exactly 0 (relu(0)=0, w2_pad=0)."""
    pad = HIDDEN_PAD - HIDDEN

    def prep(a):
        return jnp.pad(a, ((0, 0), (0, pad))).reshape(NC, CHUNK)

    return prep(w1), prep(b1), prep(w2)


def neural_network_forward(x, w1p, b1p, w2p, b2):
    """out = relu(x @ w1 + b1) @ w2.T + b2
    x: (B, 1); w1p/b1p/w2p: (NC, CHUNK) prepared via prepare_params; b2: (1, 1)."""
    B = x.shape[0]
    TB = min(MAX_TB, _round_up(max(B, 1), 8))
    B_pad = _round_up(B, TB)
    if B_pad != B:
        x = jnp.pad(x, ((0, B_pad - B), (0, 0)))
    NB = B_pad // TB

    out = pl.pallas_call(
        mlp_kernel,
        out_shape=jax.ShapeDtypeStruct((B_pad, 1), jnp.float32),
        grid_spec=pltpu.PrefetchScalarGridSpec(
            num_scalar_prefetch=0,
            grid=(NB,),
            in_specs=[
                pl.BlockSpec((TB, 1), lambda i: (i, 0)),        # x batch tile
                pl.BlockSpec((NC, CHUNK), lambda i: (0, 0)),    # w1 (resident)
                pl.BlockSpec((NC, CHUNK), lambda i: (0, 0)),    # b1 (resident)
                pl.BlockSpec((NC, CHUNK), lambda i: (0, 0)),    # w2 (resident)
                pl.BlockSpec((1, 1), lambda i: (0, 0)),         # b2
            ],
            out_specs=pl.BlockSpec((TB, 1), lambda i: (i, 0)),
        ),
        compiler_params=pltpu.CompilerParams(
            dimension_semantics=("parallel",),
        ),
    )(x, w1p, b1p, w2p, b2)
    return out[:B]


def init_params(key):
    """Deterministic init mimicking nn.Linear's uniform(-1/sqrt(in), 1/sqrt(in))."""
    k1, k2, k3, k4 = jax.random.split(key, 4)
    bound1 = 1.0                                     # 1/sqrt(in_features=1)
    w1 = jax.random.uniform(k1, (1, HIDDEN), jnp.float32, -bound1, bound1)  # hidden1.weight^T
    b1 = jax.random.uniform(k2, (1, HIDDEN), jnp.float32, -bound1, bound1)  # hidden1.bias
    bound2 = 1.0 / (HIDDEN ** 0.5)
    w2 = jax.random.uniform(k3, (1, HIDDEN), jnp.float32, -bound2, bound2)  # output.weight
    b2 = jax.random.uniform(k4, (1, 1), jnp.float32, -bound2, bound2)       # output.bias
    return w1, b1, w2, b2


if __name__ == "__main__":
    key = jax.random.PRNGKey(0)
    kx, kp = jax.random.split(key)

    batch = 8
    x = jax.random.normal(kx, (batch, 1), jnp.float32)
    w1, b1, w2, b2 = init_params(kp)

    # One-time (init/param-load time) padding + chunking of the weights.
    w1p, b1p, w2p = prepare_params(w1, b1, w2)

    out = jax.block_until_ready(neural_network_forward(x, w1p, b1p, w2p, b2))
    ref = jnp.maximum(x @ w1 + b1, 0.0) @ w2.T + b2
    assert out.shape == (batch, 1)
    assert jnp.allclose(out, ref, rtol=1e-4, atol=1e-4), "mismatch vs reference"

    # Ragged batch exercises the batch-padding path (no B % TB restriction).
    x2 = jax.random.normal(jax.random.PRNGKey(1), (5, 1), jnp.float32)
    out2 = jax.block_until_ready(neural_network_forward(x2, w1p, b1p, w2p, b2))
    ref2 = jnp.maximum(x2 @ w1 + b1, 0.0) @ w2.T + b2
    assert out2.shape == (5, 1)
    assert jnp.allclose(out2, ref2, rtol=1e-4, atol=1e-4), "mismatch vs reference (ragged)"

    print("KERNEL_OK")
</pallas_src>

<mosaic_0001>
module attributes {stable_mosaic.version = 11 : i64} {
  func.func @mlp_kernel(%arg0: i32, %arg1: memref<8x1xf32, #tpu.memory_space<vmem>>, %arg2: memref<10x2048xf32, #tpu.memory_space<vmem>>, %arg3: memref<10x2048xf32, #tpu.memory_space<vmem>>, %arg4: memref<10x2048xf32, #tpu.memory_space<vmem>>, %arg5: memref<1x1xf32, #tpu.memory_space<vmem>>, %arg6: memref<8x1xf32, #tpu.memory_space<vmem>>) attributes {dimension_semantics = [#tpu.dimension_semantics<parallel>], iteration_bounds = array<i64: 1>, scalar_prefetch = 0 : i64, scratch_operands = 0 : i64, tpu.core_type = #tpu.core_type<tc>, window_params = [{transform_indices = @transform_0, window_bounds = array<i64: 8, 1>}, {pipeline_mode = #tpu.pipeline_mode<synchronous>, transform_indices = @transform_1, window_bounds = array<i64: 10, 2048>}, {pipeline_mode = #tpu.pipeline_mode<synchronous>, transform_indices = @transform_2, window_bounds = array<i64: 10, 2048>}, {pipeline_mode = #tpu.pipeline_mode<synchronous>, transform_indices = @transform_3, window_bounds = array<i64: 10, 2048>}, {pipeline_mode = #tpu.pipeline_mode<synchronous>, transform_indices = @transform_4, window_bounds = array<i64: 1, 1>}, {transform_indices = @transform_5, window_bounds = array<i64: 8, 1>}]} {
    %c0 = arith.constant 0 : index
    %c0_0 = arith.constant 0 : index
    %0 = vector.load %arg1[%c0, %c0_0] : memref<8x1xf32, #tpu.memory_space<vmem>>, vector<8x1xf32>
    %cst = arith.constant 0.000000e+00 : f32
    %1 = vector.broadcast %cst : f32 to vector<8x128xf32>
    %c0_i32 = arith.constant 0 : i32
    %c10_i32 = arith.constant 10 : i32
    %2 = arith.addi %c0_i32, %c10_i32 : i32
    %c1_i32 = arith.constant 1 : i32
    %3 = scf.for %arg7 = %c0_i32 to %2 step %c1_i32 iter_args(%arg8 = %1) -> (vector<8x128xf32>)  : i32 {
      %10 = arith.index_cast %arg7 : i32 to index
      %c0_7 = arith.constant 0 : index
      %11 = vector.load %arg2[%10, %c0_7] : memref<10x2048xf32, #tpu.memory_space<vmem>>, vector<1x2048xf32>
      %12 = arith.index_cast %arg7 : i32 to index
      %c0_8 = arith.constant 0 : index
      %13 = vector.load %arg3[%12, %c0_8] : memref<10x2048xf32, #tpu.memory_space<vmem>>, vector<1x2048xf32>
      %14 = arith.index_cast %arg7 : i32 to index
      %c0_9 = arith.constant 0 : index
      %15 = vector.load %arg4[%14, %c0_9] : memref<10x2048xf32, #tpu.memory_space<vmem>>, vector<1x2048xf32>
      %16 = vector.broadcast %0 : vector<8x1xf32> to vector<8x2048xf32>
      %17 = vector.broadcast %11 : vector<1x2048xf32> to vector<8x2048xf32>
      %18 = arith.mulf %16, %17 : vector<8x2048xf32>
      %19 = vector.broadcast %13 : vector<1x2048xf32> to vector<8x2048xf32>
      %20 = arith.addf %18, %19 : vector<8x2048xf32>
      %cst_10 = arith.constant 0.000000e+00 : f32
      %21 = vector.broadcast %cst_10 : f32 to vector<8x2048xf32>
      %22 = arith.maximumf %20, %21 : vector<8x2048xf32>
      %23 = vector.broadcast %15 : vector<1x2048xf32> to vector<8x2048xf32>
      %24 = arith.mulf %22, %23 : vector<8x2048xf32>
      %25 = vector.extract_strided_slice %24 {offsets = [0, 0], sizes = [8, 128], strides = [1, 1]} : vector<8x2048xf32> to vector<8x128xf32>
      %26 = arith.addf %arg8, %25 : vector<8x128xf32>
      %27 = vector.extract_strided_slice %24 {offsets = [0, 128], sizes = [8, 128], strides = [1, 1]} : vector<8x2048xf32> to vector<8x128xf32>
      %28 = arith.addf %26, %27 : vector<8x128xf32>
      %29 = vector.extract_strided_slice %24 {offsets = [0, 256], sizes = [8, 128], strides = [1, 1]} : vector<8x2048xf32> to vector<8x128xf32>
      %30 = arith.addf %28, %29 : vector<8x128xf32>
      %31 = vector.extract_strided_slice %24 {offsets = [0, 384], sizes = [8, 128], strides = [1, 1]} : vector<8x2048xf32> to vector<8x128xf32>
      %32 = arith.addf %30, %31 : vector<8x128xf32>
      %33 = vector.extract_strided_slice %24 {offsets = [0, 512], sizes = [8, 128], strides = [1, 1]} : vector<8x2048xf32> to vector<8x128xf32>
      %34 = arith.addf %32, %33 : vector<8x128xf32>
      %35 = vector.extract_strided_slice %24 {offsets = [0, 640], sizes = [8, 128], strides = [1, 1]} : vector<8x2048xf32> to vector<8x128xf32>
      %36 = arith.addf %34, %35 : vector<8x128xf32>
      %37 = vector.extract_strided_slice %24 {offsets = [0, 768], sizes = [8, 128], strides = [1, 1]} : vector<8x2048xf32> to vector<8x128xf32>
      %38 = arith.addf %36, %37 : vector<8x128xf32>
      %39 = vector.extract_strided_slice %24 {offsets = [0, 896], sizes = [8, 128], strides = [1, 1]} : vector<8x2048xf32> to vector<8x128xf32>
      %40 = arith.addf %38, %39 : vector<8x128xf32>
      %41 = vector.extract_strided_slice %24 {offsets = [0, 1024], sizes = [8, 128], strides = [1, 1]} : vector<8x2048xf32> to vector<8x128xf32>
      %42 = arith.addf %40, %41 : vector<8x128xf32>
      %43 = vector.extract_strided_slice %24 {offsets = [0, 1152], sizes = [8, 128], strides = [1, 1]} : vector<8x2048xf32> to vector<8x128xf32>
      %44 = arith.addf %42, %43 : vector<8x128xf32>
      %45 = vector.extract_strided_slice %24 {offsets = [0, 1280], sizes = [8, 128], strides = [1, 1]} : vector<8x2048xf32> to vector<8x128xf32>
      %46 = arith.addf %44, %45 : vector<8x128xf32>
      %47 = vector.extract_strided_slice %24 {offsets = [0, 1408], sizes = [8, 128], strides = [1, 1]} : vector<8x2048xf32> to vector<8x128xf32>
      %48 = arith.addf %46, %47 : vector<8x128xf32>
      %49 = vector.extract_strided_slice %24 {offsets = [0, 1536], sizes = [8, 128], strides = [1, 1]} : vector<8x2048xf32> to vector<8x128xf32>
      %50 = arith.addf %48, %49 : vector<8x128xf32>
      %51 = vector.extract_strided_slice %24 {offsets = [0, 1664], sizes = [8, 128], strides = [1, 1]} : vector<8x2048xf32> to vector<8x128xf32>
      %52 = arith.addf %50, %51 : vector<8x128xf32>
      %53 = vector.extract_strided_slice %24 {offsets = [0, 1792], sizes = [8, 128], strides = [1, 1]} : vector<8x2048xf32> to vector<8x128xf32>
      %54 = arith.addf %52, %53 : vector<8x128xf32>
      %55 = vector.extract_strided_slice %24 {offsets = [0, 1920], sizes = [8, 128], strides = [1, 1]} : vector<8x2048xf32> to vector<8x128xf32>
      %56 = arith.addf %54, %55 : vector<8x128xf32>
      scf.yield %56 : vector<8x128xf32>
    }
    %c10_i32_1 = arith.constant 10 : i32
    %cst_2 = arith.constant dense<0.000000e+00> : vector<8xf32>
    %4 = vector.multi_reduction <add>, %3, %cst_2 [1] : vector<8x128xf32> to vector<8xf32>
    %5 = vector.shape_cast %4 : vector<8xf32> to vector<8x1xf32>
    %c0_3 = arith.constant 0 : index
    %c0_4 = arith.constant 0 : index
    %6 = vector.load %arg5[%c0_3, %c0_4] : memref<1x1xf32, #tpu.memory_space<vmem>>, vector<1x1xf32>
    %7 = vector.broadcast %6 : vector<1x1xf32> to vector<8x1xf32>
    %8 = arith.addf %5, %7 : vector<8x1xf32>
    %c0_5 = arith.constant 0 : index
    %c0_6 = arith.constant 0 : index
    %9 = vector.load %arg6[%c0_5, %c0_6] : memref<8x1xf32, #tpu.memory_space<vmem>>, vector<8x1xf32>
    tpu.vector_store %arg6[%c0_5, %c0_6], %8 {strides = array<i32>} : memref<8x1xf32, #tpu.memory_space<vmem>>, vector<8x1xf32>,
    return
  }
  func.func @transform_0(%arg0: i32) -> (i32, i32) {
    %c0_i32 = arith.constant 0 : i32
    %c0_i32_0 = arith.constant 0 : i32
    return %arg0, %c0_i32 : i32, i32
  }
  func.func @transform_1(%arg0: i32) -> (i32, i32) {
    %c0_i32 = arith.constant 0 : i32
    %c0_i32_0 = arith.constant 0 : i32
    %c0_i32_1 = arith.constant 0 : i32
    return %c0_i32, %c0_i32_0 : i32, i32
  }
  func.func @transform_2(%arg0: i32) -> (i32, i32) {
    %c0_i32 = arith.constant 0 : i32
    %c0_i32_0 = arith.constant 0 : i32
    %c0_i32_1 = arith.constant 0 : i32
    return %c0_i32, %c0_i32_0 : i32, i32
  }
  func.func @transform_3(%arg0: i32) -> (i32, i32) {
    %c0_i32 = arith.constant 0 : i32
    %c0_i32_0 = arith.constant 0 : i32
    %c0_i32_1 = arith.constant 0 : i32
    return %c0_i32, %c0_i32_0 : i32, i32
  }
  func.func @transform_4(%arg0: i32) -> (i32, i32) {
    %c0_i32 = arith.constant 0 : i32
    %c0_i32_0 = arith.constant 0 : i32
    %c0_i32_1 = arith.constant 0 : i32
    return %c0_i32, %c0_i32_0 : i32, i32
  }
  func.func @transform_5(%arg0: i32) -> (i32, i32) {
    %c0_i32 = arith.constant 0 : i32
    %c0_i32_0 = arith.constant 0 : i32
    return %arg0, %c0_i32 : i32, i32
  }
}

</mosaic_0001>

<llo_original>
// kernel: tpu_custom_call.1
$region0: #{tpu_custom_call.1}
  #allocation0 [shape = 'u32[]', space=smem, size = 0x4, offset = 0x4, fixed_abs, tag = 'smem constant byte address 0x4 - core index']
  #allocation1 [shape = 'u32[72,128]{1,0:T(1,128)}', space=vmem, size = 0x9000, scoped, tag = 'internal scratch']
  #allocation2 [shape = 'f32[1,1]{1,0:T(1,128)S(1)}', space=vmem, size = 0x200, scoped, tag = 'scoped memory for tpu_custom_call.1']
  %s0 = inlined_call_operand.vmem [shape: f32[8,1], index: 0, kind: input, shape index: {}]
  %s1 = inlined_call_operand.hbm [shape: f32[10,2048], index: 1, kind: input, shape index: {}]
  %s2 = inlined_call_operand.hbm [shape: f32[10,2048], index: 2, kind: input, shape index: {}]
  %s3 = inlined_call_operand.hbm [shape: f32[10,2048], index: 3, kind: input, shape index: {}]
  %s4 = inlined_call_operand.<no memory space> [shape: f32[1,1], index: 4, kind: input, shape index: {}]
  %s5 = inlined_call_operand.vmem [shape: f32[8,1], index: 5, kind: output, shape index: {}]
  %s6 = sld [smem:[#allocation0]]
  $region49: #{tpu_custom_call.1} parent=0
    _
  %s8 = ssub.s32 1, %s6
  %s9 = scalar_select 0, %s8, %s6
  %v10 = vstv %s4
  %11 = vst [vmem:[#allocation2] sm:$0x1] %v10
  $region1: #{tpu_custom_call.1} parent=0
    #allocation3 [shape = 'u8[131072]{0}', space=vmem, size = 0x20000, scoped, tag = 'input window, operand 1, single buffered']
    #allocation4 [shape = 's32[1]{0}', space=sflag, size = 0x4, scoped, tag = 'scoped memory for tpu_custom_call.1']
    #allocation5 [shape = 'u8[131072]{0}', space=vmem, size = 0x20000, scoped, tag = 'input window, operand 2, single buffered']
    #allocation6 [shape = 's32[1]{0}', space=sflag, size = 0x4, scoped, tag = 'scoped memory for tpu_custom_call.1']
    #allocation7 [shape = 'u8[131072]{0}', space=vmem, size = 0x20000, scoped, tag = 'input window, operand 3, single buffered']
    %12 = vsyncpa [#allocation4], 0
    %13 = vsyncpa [#allocation6], 0
    // Predicated region
    $region2: #{tpu_custom_call.1} parent=1 // pred_check
      _
    $region3: #{tpu_custom_call.1} parent=1 // pred_check_branch
      %15 = sbr.rel (0) target = $region5
    $region4: #{tpu_custom_call.1} parent=1 // pred_region
      _
    $region5: #{tpu_custom_call.1} parent=1 // pred_fallthru
      _
    // Predicated region
    $region6: #{tpu_custom_call.1} parent=1 // pred_check
      _
    $region7: #{tpu_custom_call.1} parent=1 // pred_check_branch
      %17 = sbr.rel (0) target = $region9
    $region8: #{tpu_custom_call.1} parent=1 // pred_region
      %19 = vsyncadd [#allocation4], 0
      %s20 = sshll.u32 %s1, 4
      %s21 = int_to_ptr.hbm [resolvable:$true] %s20
      %s22 = sshll.u32 [#allocation3], 4
      %s23 = int_to_ptr.vmem [resolvable:$true] %s22
      %28 = dma.hbm_to_vmem [thread:$0]  %s21, 4096, %s23, [#allocation4], 2048, 2048, 128
    $region9: #{tpu_custom_call.1} parent=1 // pred_fallthru
      _
    // Predicated region
    $region10: #{tpu_custom_call.1} parent=1 // pred_check
      _
    $region11: #{tpu_custom_call.1} parent=1 // pred_check_branch
      %30 = sbr.rel (0) target = $region13
    $region12: #{tpu_custom_call.1} parent=1 // pred_region
      %32 = vsyncadd [#allocation6], 0
      %s33 = sshll.u32 %s2, 4
      %s34 = int_to_ptr.hbm [resolvable:$true] %s33
      %s35 = sshll.u32 [#allocation5], 4
      %s36 = int_to_ptr.vmem [resolvable:$true] %s35
      %41 = dma.hbm_to_vmem [thread:$0]  %s34, 4096, %s36, [#allocation6], 2048, 2048, 128
    $region13: #{tpu_custom_call.1} parent=1 // pred_fallthru
      _
    // Predicated region
    $region14: #{tpu_custom_call.1} parent=1 // pred_check
      _
    $region15: #{tpu_custom_call.1} parent=1 // pred_check_branch
      %43 = sbr.rel (0) target = $region17
    $region16: #{tpu_custom_call.1} parent=1 // pred_region
      %45 = vsyncadd [#allocation6], 0
      %s46 = sshll.u32 %s3, 4
      %s47 = int_to_ptr.hbm [resolvable:$true] %s46
      %s48 = sshll.u32 [#allocation7], 4
      %s49 = int_to_ptr.vmem [resolvable:$true] %s48
      %54 = dma.hbm_to_vmem [thread:$0]  %s47, 4096, %s49, [#allocation6], 2048, 2048, 128
    $region17: #{tpu_custom_call.1} parent=1 // pred_fallthru
      _
    // Predicated region
    $region18: #{tpu_custom_call.1} parent=1 // pred_check
      _
    $region19: #{tpu_custom_call.1} parent=1 // pred_check_branch
      %56 = sbr.rel (0) target = $region21
    $region20: #{tpu_custom_call.1} parent=1 // pred_region
      _
    $region21: #{tpu_custom_call.1} parent=1 // pred_fallthru
      _
    // Predicated region
    $region22: #{tpu_custom_call.1} parent=1 // pred_check
      _
    $region23: #{tpu_custom_call.1} parent=1 // pred_check_branch
      %58 = sbr.rel (0) target = $region25
    $region24: #{tpu_custom_call.1} parent=1 // pred_region
      %60 = dma.done [#allocation4], 4096
    $region25: #{tpu_custom_call.1} parent=1 // pred_fallthru
      _
    // Predicated region
    $region26: #{tpu_custom_call.1} parent=1 // pred_check
      _
    $region27: #{tpu_custom_call.1} parent=1 // pred_check_branch
      %62 = sbr.rel (0) target = $region29
    $region28: #{tpu_custom_call.1} parent=1 // pred_region
      %64 = dma.done [#allocation6], 4096
    $region29: #{tpu_custom_call.1} parent=1 // pred_fallthru
      _
    // Predicated region
    $region30: #{tpu_custom_call.1} parent=1 // pred_check
      _
    $region31: #{tpu_custom_call.1} parent=1 // pred_check_branch
      %66 = sbr.rel (0) target = $region33
    $region32: #{tpu_custom_call.1} parent=1 // pred_region
      %68 = dma.done [#allocation6], 4096
    $region33: #{tpu_custom_call.1} parent=1 // pred_fallthru
      _
    %v69 = vld [vmem:[%s0] sm:$0xff]
    loop: start=0, step=1, limit=10
    $region34: #{tpu_custom_call.1} parent=1 // loop_pre_header
      _
    $region35: #{tpu_custom_call.1} parent=1 // loop_header
      %s71 = sphi 0, %s75
      %p72 = scmp.ge.s32.totalorder %s71, 10
      %v76 = vphi 0.0, %v297
    $region36: #{tpu_custom_call.1} parent=1 // loop_header_branch
      %74 = sbr.rel (%p72) target = $region40
    $region37: #{tpu_custom_call.1} parent=1 // loop_body
      %s77 = sshra.s32 %s71, 3
      %s78 = sand.u32 %s71, 7
      %s79 = sshra.s32 %s71, 3
      %s80 = sand.u32 %s71, 7
      %s81 = smul.u32 %s77, 16
      %s82 = smul.u32 %s81, 8
      %s83 = sadd.s32 %s82, %s80
      %s84 = scalar_lea.vmem [#allocation3], %s83
      %v85 = vld [vmem:[%s84] ss:$8 sm:$0xf]
      %v86 = vld [vmem:[%s84] ss:$8 sm:$0xf0]
      %v87 = vor.u32 %v85, %v86
      %s88 = sadd.s32 %s81, 8
      %s89 = smul.u32 %s88, 8
      %s90 = sadd.s32 %s89, %s80
      %s91 = scalar_lea.vmem [#allocation3], %s90
      %v92 = vld [vmem:[%s91] ss:$8 sm:$0xf]
      %v93 = vld [vmem:[%s91] ss:$8 sm:$0xf0]
      %v94 = vor.u32 %v92, %v93
      %s95 = scalar_lea.vmem [#allocation5], %s83
      %v96 = vld [vmem:[%s95] ss:$8 sm:$0xf]
      %v97 = vld [vmem:[%s95] ss:$8 sm:$0xf0]
      %v98 = vor.u32 %v96, %v97
      %s99 = scalar_lea.vmem [#allocation5], %s90
      %v100 = vld [vmem:[%s99] ss:$8 sm:$0xf]
      %v101 = vld [vmem:[%s99] ss:$8 sm:$0xf0]
      %v102 = vor.u32 %v100, %v101
      %s103 = scalar_lea.vmem [#allocation7], %s83
      %v104 = vld [vmem:[%s103] ss:$8 sm:$0xf]
      %v105 = vld [vmem:[%s103] ss:$8 sm:$0xf0]
      %v106 = vor.u32 %v104, %v105
      %s107 = scalar_lea.vmem [#allocation7], %s90
      %v108 = vld [vmem:[%s107] ss:$8 sm:$0xf]
      %v109 = vld [vmem:[%s107] ss:$8 sm:$0xf0]
      %v110 = vor.u32 %v108, %v109
      %112 = vset.pattern.permute.xlu0 0
      %113 = vperm.xlu0 %112, %v69
      %v114 = vpop.permute.xlu0 %113
      %v118 = vperm.slane %v87, 0
      %v119 = vperm.slane %v87, 1
      %v120 = vperm.slane %v87, 2
      %v121 = vperm.slane %v87, 3
      %v122 = vperm.slane %v87, 4
      %v123 = vperm.slane %v87, 5
      %v124 = vperm.slane %v87, 6
      %v125 = vperm.slane %v87, 7
      %v126 = vperm.slane %v94, 0
      %v127 = vperm.slane %v94, 1
      %v128 = vperm.slane %v94, 2
      %v129 = vperm.slane %v94, 3
      %v130 = vperm.slane %v94, 4
      %v131 = vperm.slane %v94, 5
      %v132 = vperm.slane %v94, 6
      %v133 = vperm.slane %v94, 7
      %v150 = vmul.f32 %v114, %v118
      %v151 = vmul.f32 %v114, %v119
      %v152 = vmul.f32 %v114, %v120
      %v153 = vmul.f32 %v114, %v121
      %v154 = vmul.f32 %v114, %v122
      %v155 = vmul.f32 %v114, %v123
      %v156 = vmul.f32 %v114, %v124
      %v157 = vmul.f32 %v114, %v125
      %v158 = vmul.f32 %v114, %v126
      %v159 = vmul.f32 %v114, %v127
      %v160 = vmul.f32 %v114, %v128
      %v161 = vmul.f32 %v114, %v129
      %v162 = vmul.f32 %v114, %v130
      %v163 = vmul.f32 %v114, %v131
      %v164 = vmul.f32 %v114, %v132
      %v165 = vmul.f32 %v114, %v133
      %v168 = vperm.slane %v98, 0
      %v169 = vperm.slane %v98, 1
      %v170 = vperm.slane %v98, 2
      %v171 = vperm.slane %v98, 3
      %v172 = vperm.slane %v98, 4
      %v173 = vperm.slane %v98, 5
      %v174 = vperm.slane %v98, 6
      %v175 = vperm.slane %v98, 7
      %v176 = vperm.slane %v102, 0
      %v177 = vperm.slane %v102, 1
      %v178 = vperm.slane %v102, 2
      %v179 = vperm.slane %v102, 3
      %v180 = vperm.slane %v102, 4
      %v181 = vperm.slane %v102, 5
      %v182 = vperm.slane %v102, 6
      %v183 = vperm.slane %v102, 7
      %v200 = vadd.f32 %v150, %v168
      %v201 = vadd.f32 %v151, %v169
      %v202 = vadd.f32 %v152, %v170
      %v203 = vadd.f32 %v153, %v171
      %v204 = vadd.f32 %v154, %v172
      %v205 = vadd.f32 %v155, %v173
      %v206 = vadd.f32 %v156, %v174
      %v207 = vadd.f32 %v157, %v175
      %v208 = vadd.f32 %v158, %v176
      %v209 = vadd.f32 %v159, %v177
      %v210 = vadd.f32 %v160, %v178
      %v211 = vadd.f32 %v161, %v179
      %v212 = vadd.f32 %v162, %v180
      %v213 = vadd.f32 %v163, %v181
      %v214 = vadd.f32 %v164, %v182
      %v215 = vadd.f32 %v165, %v183
      %v216 = vmax.f32 %v200, 0.0
      %v217 = vmax.f32 %v201, 0.0
      %v218 = vmax.f32 %v202, 0.0
      %v219 = vmax.f32 %v203, 0.0
      %v220 = vmax.f32 %v204, 0.0
      %v221 = vmax.f32 %v205, 0.0
      %v222 = vmax.f32 %v206, 0.0
      %v223 = vmax.f32 %v207, 0.0
      %v224 = vmax.f32 %v208, 0.0
      %v225 = vmax.f32 %v209, 0.0
      %v226 = vmax.f32 %v210, 0.0
      %v227 = vmax.f32 %v211, 0.0
      %v228 = vmax.f32 %v212, 0.0
      %v229 = vmax.f32 %v213, 0.0
      %v230 = vmax.f32 %v214, 0.0
      %v231 = vmax.f32 %v215, 0.0
      %v234 = vperm.slane %v106, 0
      %v235 = vperm.slane %v106, 1
      %v236 = vperm.slane %v106, 2
      %v237 = vperm.slane %v106, 3
      %v238 = vperm.slane %v106, 4
      %v239 = vperm.slane %v106, 5
      %v240 = vperm.slane %v106, 6
      %v241 = vperm.slane %v106, 7
      %v242 = vperm.slane %v110, 0
      %v243 = vperm.slane %v110, 1
      %v244 = vperm.slane %v110, 2
      %v245 = vperm.slane %v110, 3
      %v246 = vperm.slane %v110, 4
      %v247 = vperm.slane %v110, 5
      %v248 = vperm.slane %v110, 6
      %v249 = vperm.slane %v110, 7
      %v266 = vmul.f32 %v216, %v234
      %v267 = vmul.f32 %v217, %v235
      %v268 = vmul.f32 %v218, %v236
      %v269 = vmul.f32 %v219, %v237
      %v270 = vmul.f32 %v220, %v238
      %v271 = vmul.f32 %v221, %v239
      %v272 = vmul.f32 %v222, %v240
      %v273 = vmul.f32 %v223, %v241
      %v274 = vmul.f32 %v224, %v242
      %v275 = vmul.f32 %v225, %v243
      %v276 = vmul.f32 %v226, %v244
      %v277 = vmul.f32 %v227, %v245
      %v278 = vmul.f32 %v228, %v246
      %v279 = vmul.f32 %v229, %v247
      %v280 = vmul.f32 %v230, %v248
      %v281 = vmul.f32 %v231, %v249
      %v282 = vadd.f32 %v76, %v266
      %v283 = vadd.f32 %v282, %v267
      %v284 = vadd.f32 %v283, %v268
      %v285 = vadd.f32 %v284, %v269
      %v286 = vadd.f32 %v285, %v270
      %v287 = vadd.f32 %v286, %v271
      %v288 = vadd.f32 %v287, %v272
      %v289 = vadd.f32 %v288, %v273
      %v290 = vadd.f32 %v289, %v274
      %v291 = vadd.f32 %v290, %v275
      %v292 = vadd.f32 %v291, %v276
      %v293 = vadd.f32 %v292, %v277
      %v294 = vadd.f32 %v293, %v278
      %v295 = vadd.f32 %v294, %v279
      %v296 = vadd.f32 %v295, %v280
      %v297 = vadd.f32 %v296, %v281
    $region38: #{tpu_custom_call.1} parent=1 // loop_footer
      %s75 = sadd.s32 1, %s71
    $region39: #{tpu_custom_call.1} parent=1 // loop_footer_branch
      %70 = sbr.rel target = $region35
    $region40: #{tpu_custom_call.1} parent=1 // loop_exit
      _
    %298 = vadd.xlane.f32.xlu0 %v76
    %v299 = vpop.xlane.xlu0 %298
    %v300 = vld [vmem:[#allocation2] sm:$0x1]
    %v302 = vperm.slane %v300, 0
    %v304 = vadd.f32 %v299, %v302
    %vm305 = vcmask 7168
    %306 = vst.msk [vmem:[%s5] sm:$0xff] %vm305, %v304
    // Predicated region
    $region41: #{tpu_custom_call.1} parent=1 // pred_check
      _
    $region42: #{tpu_custom_call.1} parent=1 // pred_check_branch
      %308 = sbr.rel (0) target = $region44
    $region43: #{tpu_custom_call.1} parent=1 // pred_region
      _
    $region44: #{tpu_custom_call.1} parent=1 // pred_fallthru
      _
    // Predicated region
    $region45: #{tpu_custom_call.1} parent=1 // pred_check
      _
    $region46: #{tpu_custom_call.1} parent=1 // pred_check_branch
      %310 = sbr.rel (0) target = $region48
    $region47: #{tpu_custom_call.1} parent=1 // pred_region
      _
    $region48: #{tpu_custom_call.1} parent=1 // pred_fallthru
      _
    %311 = vsyncpa [#allocation4], 1
    %312 = vsyncpa [#allocation6], 1

</llo_original>
